<compile_context>
chip_gen: v7x
topology: tpu7x:2x2x1
jax: 0.10.0
libtpu: 0.0.40
codegen_flags: <defaults>
</compile_context>

<pallas_src>
import functools
import math

import jax
import jax.numpy as jnp
from jax import lax
from jax.experimental import pallas as pl
from jax.experimental.pallas import tpu as pltpu


def _round_up(a, b):
    return (a + b - 1) // b * b


def _cdiv(a, b):
    return -(-a // b)


@functools.lru_cache(maxsize=None)
def _tpu_generation():
    try:
        kind = jax.devices()[0].device_kind.lower()
    except Exception:
        return 6
    for g in (7, 6, 5, 4, 3, 2):
        if f"v{g}" in kind:
            return g
    if "tpu7" in kind or "7x" in kind:
        return 7
    return 6


@functools.lru_cache(maxsize=None)
def _tpu_vmem_capacity():
    try:
        return int(pltpu.get_tpu_info().vmem_capacity_bytes)
    except Exception:
        gen = _tpu_generation()
        if gen >= 7:
            return 64 << 20      # v7x
        if gen >= 5:
            return 128 << 20     # v5e/v6e
        return 16 << 20          # conservative for older chips


def _pad_dim(d):
    p = _round_up(d, 128)
    # v6e/v7x MXU tiles are 256 wide; prefer 256-aligned dims when the extra
    # zero padding is relatively small (skip for small dims to limit waste).
    if _tpu_generation() >= 6 and p >= 512 and p % 256 != 0:
        p = _round_up(p, 256)
    return p


def _ff_kernel(x_ref, w1_ref, b1_ref, w2_ref, b2_ref, o_ref, xn_ref, acc_ref,
               *, dim_real, gelu_bf16):
    """One (row-tile, hidden-tile) grid step of LN -> Linear -> GELU -> Linear."""
    k = pl.program_id(1)

    @pl.when(k == 0)
    def _():
        # Mask-free one-pass LayerNorm stats: padded lanes are zero, so sum(x)
        # and sum(x*x) over the padded width equal the sums over the real dim.
        x = x_ref[...].astype(jnp.float32)
        inv_d = 1.0 / dim_real
        mean = jnp.sum(x, axis=-1, keepdims=True) * inv_d
        ex2 = jnp.sum(x * x, axis=-1, keepdims=True) * inv_d
        var = jnp.maximum(ex2 - mean * mean, 0.0)
        # gamma/beta are pre-folded into W1/b1, so only normalize here.
        xn_ref[...] = ((x - mean) * lax.rsqrt(var + 1e-5)).astype(xn_ref.dtype)
        acc_ref[...] = jnp.zeros_like(acc_ref)

    # Linear(dim -> hidden tile) on the MXU: bf16 operands, f32 accumulate.
    h = jnp.dot(xn_ref[...], w1_ref[...],
                preferred_element_type=jnp.float32) + b1_ref[...]
    if gelu_bf16:  # v6e/v7x have bf16 VPU/EUP: 2x lane density for the GELU
        h = h.astype(jnp.bfloat16)
    # tanh-approx GELU (tanh runs on the EUP; erf is a VALU polynomial).
    c = 0.7978845608028654  # sqrt(2/pi)
    h = 0.5 * h * (1.0 + jnp.tanh(c * (h + 0.044715 * (h * h * h))))

    # Linear(hidden tile -> dim), accumulated over hidden tiles in f32.
    acc_ref[...] += jnp.dot(h.astype(w2_ref.dtype), w2_ref[...],
                            preferred_element_type=jnp.float32)

    @pl.when(k == pl.num_programs(1) - 1)
    def _():
        o_ref[...] = (acc_ref[...] + b2_ref[...]).astype(o_ref.dtype)


def _plan(rows, dp, hp, xbytes, single_buffer):
    """Pick (tm, th, k_tiles, nbuf_w, rows_pad, vmem_limit) for this TPU gen."""
    vmem_cap = _tpu_vmem_capacity()
    budget = min(int(vmem_cap * 0.75), 100 << 20)  # ~48 MiB v7x, ~96 MiB v5e/v6e

    def est(tm, th, nbuf_w):
        return (4 * tm * dp * xbytes                 # x + out tiles, double-buffered
                + nbuf_w * 2 * (dp * th + th * dp)   # bf16 W1/W2 tiles
                + nbuf_w * 4 * 8 * (th + dp)         # f32 biases (8-sublane padded)
                + tm * dp * (2 + 4)                  # xn (bf16) + acc (f32) scratch
                + tm * th * 4)                       # GELU intermediate (f32)

    # Row tile: big (amortizes per-step overhead + weight streaming), but keep
    # >=2 row tiles when possible so both v7x TensorCores get work.
    tm = min(_round_up(rows, 16), 512)
    if rows > 16 and _cdiv(rows, tm) < 2:
        tm = max(16, _round_up(_cdiv(rows, 2), 16))

    # Hidden tile: largest 128-multiple divisor of hp that fits the budget.
    # 128 always divides hp, so the search always terminates.
    cands = [t for t in range(hp, 127, -128) if hp % t == 0]
    th = k_tiles = nbuf_w = None
    for t in cands:
        k = hp // t
        nb = 1 if (k == 1 and single_buffer) else 2
        if est(tm, t, nb) <= budget:
            th, k_tiles, nbuf_w = t, k, nb
            break
    if th is None:
        th = 128
        k_tiles = hp // 128
        nbuf_w = 1 if (k_tiles == 1 and single_buffer) else 2
        while est(tm, th, nbuf_w) > budget and tm > 16:
            tm = max(16, _round_up(tm // 2, 16))

    # k_tiles > 1 => W1/W2 are re-streamed from HBM once per row tile; grow the
    # row tile to amortize, as long as it fits and keeps >=2 row tiles.
    if k_tiles > 1:
        cap = _round_up(rows, 16)
        while tm < cap:
            tm2 = min(tm * 2, cap)
            if _cdiv(rows, tm) >= 2 and _cdiv(rows, tm2) < 2:
                break  # don't collapse to a single row tile (megacore)
            if est(tm2, th, nbuf_w) > budget:
                break
            tm = tm2

    rows_pad = _round_up(rows, tm)
    vmem_limit = int(min(int(vmem_cap * 0.9),               # never exceed physical
                         max(2 * est(tm, th, nbuf_w), 32 << 20)))
    return tm, th, k_tiles, nbuf_w, rows_pad, vmem_limit


def prepare_feed_forward_params(gamma, beta, w1, b1, w2, b2):
    """Fold the LayerNorm affine into the first Linear and pre-pad/cast weights.

    Run once per parameter set; feed_forward_apply reuses the result so the
    per-forward path never touches full-size f32 weight tensors again.
    """
    dim, hidden = w1.shape
    dp, hp = _pad_dim(dim), _pad_dim(hidden)

    g = gamma.astype(jnp.float32)
    bt = beta.astype(jnp.float32)
    w1f = w1.astype(jnp.float32)
    w1_fold = w1f * g[:, None]                   # diag(gamma) @ W1
    b1_fold = b1.astype(jnp.float32) + bt @ w1f  # beta @ W1 + b1

    # NOTE: on v7x the MXU also accepts fp8 weights (halves weight VMEM/HBM);
    # bf16 is kept here for accuracy parity across generations.
    w1_p = jnp.pad(w1_fold, ((0, dp - dim), (0, hp - hidden))).astype(jnp.bfloat16)
    b1_p = jnp.pad(b1_fold, (0, hp - hidden)).reshape(1, hp)
    w2_p = jnp.pad(w2.astype(jnp.float32),
                   ((0, hp - hidden), (0, dp - dim))).astype(jnp.bfloat16)
    b2_p = jnp.pad(b2.astype(jnp.float32), (0, dp - dim)).reshape(1, dp)
    return {"w1": w1_p, "b1": b1_p, "w2": w2_p, "b2": b2_p}


@functools.partial(jax.jit, static_argnames=("single_buffer",))
def _ff_impl(x, w1_p, b1_p, w2_p, b2_p, *, single_buffer=True):
    orig_shape = x.shape
    dim = orig_shape[-1]
    rows = math.prod(orig_shape[:-1])
    dp, hp = w1_p.shape
    xbytes = x.dtype.itemsize
    gelu_bf16 = _tpu_generation() >= 6          # v5e has no bf16 VPU/EUP

    tm, th, k_tiles, nbuf_w, rows_pad, vmem_limit = _plan(
        rows, dp, hp, xbytes, single_buffer)
    use_single_buffer = nbuf_w == 1
    row_tiles = rows_pad // tm

    # ---- activation layout: only pad/copy when it is not a no-op ------------
    x2 = x.reshape(rows, dim)
    if rows_pad != rows or dp != dim:
        x2 = jnp.pad(x2, ((0, rows_pad - rows), (0, dp - dim)))

    # ---- BlockSpecs ----------------------------------------------------------
    def w_spec(shape, imap):
        if use_single_buffer:
            # Grid-invariant weights/biases: one resident copy, no double buffer.
            return pl.BlockSpec(shape, imap, pipeline_mode=pl.Buffered(1))
        return pl.BlockSpec(shape, imap)

    in_specs = [
        pl.BlockSpec((tm, dp), lambda i, k: (i, 0)),   # x rows
        w_spec((dp, th), lambda i, k: (0, k)),         # W1 (gamma folded in)
        w_spec((1, th), lambda i, k: (0, k)),          # b1 (beta folded in)
        w_spec((th, dp), lambda i, k: (k, 0)),         # W2
        w_spec((1, dp), lambda i, k: (0, 0)),          # b2
    ]

    # Truthful HBM traffic: activations in + out, weights re-streamed once per
    # row tile whenever the hidden axis is tiled.
    weight_bytes = 2 * 2 * dp * hp + 4 * (hp + dp)
    weight_passes = row_tiles if k_tiles > 1 else 1
    cost = pl.CostEstimate(
        flops=4 * rows_pad * dp * hp,
        transcendentals=rows_pad * hp,
        bytes_accessed=int(2 * rows_pad * dp * xbytes + weight_passes * weight_bytes),
    )

    out = pl.pallas_call(
        functools.partial(_ff_kernel, dim_real=dim, gelu_bf16=gelu_bf16),
        out_shape=jax.ShapeDtypeStruct((rows_pad, dp), x.dtype),
        grid_spec=pltpu.PrefetchScalarGridSpec(
            num_scalar_prefetch=0,
            grid=(row_tiles, k_tiles),
            in_specs=in_specs,
            out_specs=pl.BlockSpec((tm, dp), lambda i, k: (i, 0)),
            scratch_shapes=[
                pltpu.VMEM((tm, dp), jnp.bfloat16),   # normalized activations
                pltpu.VMEM((tm, dp), jnp.float32),    # f32 output accumulator
            ],
        ),
        compiler_params=pltpu.CompilerParams(
            dimension_semantics=("parallel", "arbitrary"),
            vmem_limit_bytes=vmem_limit,
        ),
        cost_estimate=cost,
    )(x2, w1_p, b1_p, w2_p, b2_p)

    if rows_pad != rows or dp != dim:
        out = out[:rows, :dim]
    return out.reshape(orig_shape)


def feed_forward_apply(x, params):
    """x: (..., dim) -> (..., dim). Matches eval-mode PyTorch FeedForward."""
    args = (x, params["w1"], params["b1"], params["w2"], params["b2"])
    try:
        return _ff_impl(*args, single_buffer=True)
    except Exception:
        # Fallback only changes weight buffering (pl.Buffered(1) unsupported on
        # some JAX builds); numerics are identical.  A genuine kernel error
        # fails here too and propagates.
        return _ff_impl(*args, single_buffer=False)


def feed_forward(x, gamma, beta, w1, b1, w2, b2):
    """Convenience one-shot API (re-folds weights every call; prefer
    prepare_feed_forward_params + feed_forward_apply in a real model)."""
    return feed_forward_apply(
        x, prepare_feed_forward_params(gamma, beta, w1, b1, w2, b2))


def _reference(x, gamma, beta, w1, b1, w2, b2):
    xf = x.astype(jnp.float32)
    mean = jnp.mean(xf, axis=-1, keepdims=True)
    var = jnp.mean((xf - mean) ** 2, axis=-1, keepdims=True)
    xn = (xf - mean) / jnp.sqrt(var + 1e-5) * gamma + beta
    h = xn @ w1 + b1
    h = 0.5 * h * (1.0 + lax.erf(h / math.sqrt(2.0)))   # exact GELU reference
    return (h @ w2 + b2).astype(x.dtype)


if __name__ == "__main__":
    # Small transformer-FFN shapes: (batch, seq, dim) with hidden = 2 * dim.
    B, N, dim, hidden = 2, 8, 32, 64

    key = jax.random.PRNGKey(0)
    kx, kg, kb, kw1, kb1, kw2, kb2 = jax.random.split(key, 7)

    x = jax.random.normal(kx, (B, N, dim), dtype=jnp.float32)
    gamma = jnp.ones((dim,), jnp.float32) + 0.01 * jax.random.normal(kg, (dim,))
    beta = 0.01 * jax.random.normal(kb, (dim,), dtype=jnp.float32)
    # nn.Linear-style init (uniform +-1/sqrt(fan_in)), stored as (in, out)
    w1 = jax.random.uniform(kw1, (dim, hidden), jnp.float32,
                            -1 / math.sqrt(dim), 1 / math.sqrt(dim))
    b1 = jax.random.uniform(kb1, (hidden,), jnp.float32,
                            -1 / math.sqrt(dim), 1 / math.sqrt(dim))
    w2 = jax.random.uniform(kw2, (hidden, dim), jnp.float32,
                            -1 / math.sqrt(hidden), 1 / math.sqrt(hidden))
    b2 = jax.random.uniform(kb2, (dim,), jnp.float32,
                            -1 / math.sqrt(hidden), 1 / math.sqrt(hidden))

    params = prepare_feed_forward_params(gamma, beta, w1, b1, w2, b2)
    y = feed_forward_apply(x, params)
    y = jax.block_until_ready(y)

    y_ref = _reference(x, gamma, beta, w1, b1, w2, b2)
    assert y.shape == (B, N, dim)
    # bf16 MXU operands (+ bf16 GELU on v6e/v7x) and tanh-approx GELU vs an
    # exact f32/erf reference => loose tolerance.
    assert jnp.allclose(y, y_ref, atol=4e-2, rtol=4e-2), "mismatch vs reference"

    print("KERNEL_OK")
</pallas_src>

<mosaic_0001>
module attributes {stable_mosaic.version = 11 : i64} {
  func.func @_ff_kernel(%arg0: i32, %arg1: i32, %arg2: memref<16x128xf32, #tpu.memory_space<vmem>>, %arg3: memref<128x128xbf16, #tpu.memory_space<vmem>>, %arg4: memref<1x128xf32, #tpu.memory_space<vmem>>, %arg5: memref<128x128xbf16, #tpu.memory_space<vmem>>, %arg6: memref<1x128xf32, #tpu.memory_space<vmem>>, %arg7: memref<16x128xf32, #tpu.memory_space<vmem>>, %arg8: memref<16x128xbf16, #tpu.memory_space<vmem>>, %arg9: memref<16x128xf32, #tpu.memory_space<vmem>>) attributes {dimension_semantics = [#tpu.dimension_semantics<parallel>, #tpu.dimension_semantics<arbitrary>], iteration_bounds = array<i64: 1, 1>, scalar_prefetch = 0 : i64, scratch_operands = 2 : i64, tpu.core_type = #tpu.core_type<tc>, window_params = [{transform_indices = @transform_0, window_bounds = array<i64: 16, 128>}, {pipeline_mode = #tpu.pipeline_mode<synchronous>, transform_indices = @transform_1, window_bounds = array<i64: 128, 128>}, {pipeline_mode = #tpu.pipeline_mode<synchronous>, transform_indices = @transform_2, window_bounds = array<i64: 1, 128>}, {pipeline_mode = #tpu.pipeline_mode<synchronous>, transform_indices = @transform_3, window_bounds = array<i64: 128, 128>}, {pipeline_mode = #tpu.pipeline_mode<synchronous>, transform_indices = @transform_4, window_bounds = array<i64: 1, 128>}, {transform_indices = @transform_5, window_bounds = array<i64: 16, 128>}]} {
    %c0_i32 = arith.constant 0 : i32
    %0 = arith.cmpi eq, %arg1, %c0_i32 : i32
    %1 = arith.extui %0 : i1 to i32
    %c0_i32_0 = arith.constant 0 : i32
    %2 = arith.cmpi ne, %1, %c0_i32_0 : i32
    scf.if %2 {
      %c0_19 = arith.constant 0 : index
      %c0_20 = arith.constant 0 : index
      %31 = vector.load %arg2[%c0_19, %c0_20] : memref<16x128xf32, #tpu.memory_space<vmem>>, vector<16x128xf32>
      %cst_21 = arith.constant dense<0.000000e+00> : vector<16xf32>
      %32 = vector.multi_reduction <add>, %31, %cst_21 [1] : vector<16x128xf32> to vector<16xf32>
      %33 = vector.shape_cast %32 : vector<16xf32> to vector<16x1xf32>
      %cst_22 = arith.constant 3.125000e-02 : f32
      %34 = vector.broadcast %cst_22 : f32 to vector<16x1xf32>
      %35 = arith.mulf %33, %34 : vector<16x1xf32>
      %36 = arith.mulf %31, %31 : vector<16x128xf32>
      %cst_23 = arith.constant dense<0.000000e+00> : vector<16xf32>
      %37 = vector.multi_reduction <add>, %36, %cst_23 [1] : vector<16x128xf32> to vector<16xf32>
      %38 = vector.shape_cast %37 : vector<16xf32> to vector<16x1xf32>
      %cst_24 = arith.constant 3.125000e-02 : f32
      %39 = vector.broadcast %cst_24 : f32 to vector<16x1xf32>
      %40 = arith.mulf %38, %39 : vector<16x1xf32>
      %41 = arith.mulf %35, %35 : vector<16x1xf32>
      %42 = arith.subf %40, %41 : vector<16x1xf32>
      %cst_25 = arith.constant 0.000000e+00 : f32
      %43 = vector.broadcast %cst_25 : f32 to vector<16x1xf32>
      %44 = arith.maximumf %42, %43 : vector<16x1xf32>
      %45 = vector.broadcast %35 : vector<16x1xf32> to vector<16x128xf32>
      %46 = arith.subf %31, %45 : vector<16x128xf32>
      %cst_26 = arith.constant 9.99999974E-6 : f32
      %47 = vector.broadcast %cst_26 : f32 to vector<16x1xf32>
      %48 = arith.addf %44, %47 : vector<16x1xf32>
      %49 = math.rsqrt %48 : vector<16x1xf32>
      %50 = vector.broadcast %49 : vector<16x1xf32> to vector<16x128xf32>
      %51 = arith.mulf %46, %50 : vector<16x128xf32>
      %52 = arith.truncf %51 : vector<16x128xf32> to vector<16x128xbf16>
      %c0_27 = arith.constant 0 : index
      %c0_28 = arith.constant 0 : index
      %53 = vector.load %arg8[%c0_27, %c0_28] : memref<16x128xbf16, #tpu.memory_space<vmem>>, vector<16x128xbf16>
      tpu.vector_store %arg8[%c0_27, %c0_28], %52 {strides = array<i32>} : memref<16x128xbf16, #tpu.memory_space<vmem>>, vector<16x128xbf16>,
      %cst_29 = arith.constant 0.000000e+00 : f32
      %54 = vector.broadcast %cst_29 : f32 to vector<16x128xf32>
      %c0_30 = arith.constant 0 : index
      %c0_31 = arith.constant 0 : index
      %55 = vector.load %arg9[%c0_30, %c0_31] : memref<16x128xf32, #tpu.memory_space<vmem>>, vector<16x128xf32>
      tpu.vector_store %arg9[%c0_30, %c0_31], %54 {strides = array<i32>} : memref<16x128xf32, #tpu.memory_space<vmem>>, vector<16x128xf32>,
    } else {
    }
    %c0 = arith.constant 0 : index
    %c0_1 = arith.constant 0 : index
    %3 = vector.load %arg8[%c0, %c0_1] : memref<16x128xbf16, #tpu.memory_space<vmem>>, vector<16x128xbf16>
    %c0_2 = arith.constant 0 : index
    %c0_3 = arith.constant 0 : index
    %4 = vector.load %arg3[%c0_2, %c0_3] : memref<128x128xbf16, #tpu.memory_space<vmem>>, vector<128x128xbf16>
    %cst = arith.constant dense<0.000000e+00> : vector<16x128xf32>
    %5 = tpu.matmul %3, %4, %cst {dimension_numbers = #tpu.dot_dimension_numbers<[1], [0], [0], [1], [0, 0, 1, 1], [], []>} : vector<16x128xbf16>, vector<128x128xbf16>, vector<16x128xf32> -> vector<16x128xf32>
    %c0_4 = arith.constant 0 : index
    %c0_5 = arith.constant 0 : index
    %6 = vector.load %arg4[%c0_4, %c0_5] : memref<1x128xf32, #tpu.memory_space<vmem>>, vector<1x128xf32>
    %7 = vector.broadcast %6 : vector<1x128xf32> to vector<16x128xf32>
    %8 = arith.addf %5, %7 : vector<16x128xf32>
    %9 = arith.truncf %8 : vector<16x128xf32> to vector<16x128xbf16>
    %cst_6 = arith.constant 5.000000e-01 : bf16
    %10 = vector.broadcast %cst_6 : bf16 to vector<16x128xbf16>
    %11 = arith.mulf %10, %9 : vector<16x128xbf16>
    %12 = arith.mulf %9, %9 : vector<16x128xbf16>
    %13 = arith.mulf %12, %9 : vector<16x128xbf16>
    %cst_7 = arith.constant 4.467770e-02 : bf16
    %14 = vector.broadcast %cst_7 : bf16 to vector<16x128xbf16>
    %15 = arith.mulf %14, %13 : vector<16x128xbf16>
    %16 = arith.addf %9, %15 : vector<16x128xbf16>
    %cst_8 = arith.constant 7.968750e-01 : bf16
    %17 = vector.broadcast %cst_8 : bf16 to vector<16x128xbf16>
    %18 = arith.mulf %17, %16 : vector<16x128xbf16>
    %19 = math.tanh %18 : vector<16x128xbf16>
    %cst_9 = arith.constant 1.000000e+00 : bf16
    %20 = vector.broadcast %cst_9 : bf16 to vector<16x128xbf16>
    %21 = arith.addf %20, %19 : vector<16x128xbf16>
    %22 = arith.mulf %11, %21 : vector<16x128xbf16>
    %c0_10 = arith.constant 0 : index
    %c0_11 = arith.constant 0 : index
    %23 = vector.load %arg9[%c0_10, %c0_11] : memref<16x128xf32, #tpu.memory_space<vmem>>, vector<16x128xf32>
    %c0_12 = arith.constant 0 : index
    %c0_13 = arith.constant 0 : index
    %24 = vector.load %arg5[%c0_12, %c0_13] : memref<128x128xbf16, #tpu.memory_space<vmem>>, vector<128x128xbf16>
    %cst_14 = arith.constant dense<0.000000e+00> : vector<16x128xf32>
    %25 = tpu.matmul %22, %24, %cst_14 {dimension_numbers = #tpu.dot_dimension_numbers<[1], [0], [0], [1], [0, 0, 1, 1], [], []>} : vector<16x128xbf16>, vector<128x128xbf16>, vector<16x128xf32> -> vector<16x128xf32>
    %26 = arith.addf %23, %25 : vector<16x128xf32>
    %c0_15 = arith.constant 0 : index
    %c0_16 = arith.constant 0 : index
    %27 = vector.load %arg9[%c0_15, %c0_16] : memref<16x128xf32, #tpu.memory_space<vmem>>, vector<16x128xf32>
    tpu.vector_store %arg9[%c0_15, %c0_16], %26 {strides = array<i32>} : memref<16x128xf32, #tpu.memory_space<vmem>>, vector<16x128xf32>,
    %c0_i32_17 = arith.constant 0 : i32
    %28 = arith.cmpi eq, %arg1, %c0_i32_17 : i32
    %29 = arith.extui %28 : i1 to i32
    %c0_i32_18 = arith.constant 0 : i32
    %30 = arith.cmpi ne, %29, %c0_i32_18 : i32
    scf.if %30 {
      %c0_19 = arith.constant 0 : index
      %c0_20 = arith.constant 0 : index
      %31 = vector.load %arg9[%c0_19, %c0_20] : memref<16x128xf32, #tpu.memory_space<vmem>>, vector<16x128xf32>
      %c0_21 = arith.constant 0 : index
      %c0_22 = arith.constant 0 : index
      %32 = vector.load %arg6[%c0_21, %c0_22] : memref<1x128xf32, #tpu.memory_space<vmem>>, vector<1x128xf32>
      %33 = vector.broadcast %32 : vector<1x128xf32> to vector<16x128xf32>
      %34 = arith.addf %31, %33 : vector<16x128xf32>
      %c0_23 = arith.constant 0 : index
      %c0_24 = arith.constant 0 : index
      %35 = vector.load %arg7[%c0_23, %c0_24] : memref<16x128xf32, #tpu.memory_space<vmem>>, vector<16x128xf32>
      tpu.vector_store %arg7[%c0_23, %c0_24], %34 {strides = array<i32>} : memref<16x128xf32, #tpu.memory_space<vmem>>, vector<16x128xf32>,
    } else {
    }
    return
  }
  func.func @transform_0(%arg0: i32, %arg1: i32) -> (i32, i32) {
    %c0_i32 = arith.constant 0 : i32
    %c0_i32_0 = arith.constant 0 : i32
    return %arg0, %c0_i32 : i32, i32
  }
  func.func @transform_1(%arg0: i32, %arg1: i32) -> (i32, i32) {
    %c0_i32 = arith.constant 0 : i32
    %c0_i32_0 = arith.constant 0 : i32
    return %c0_i32, %arg1 : i32, i32
  }
  func.func @transform_2(%arg0: i32, %arg1: i32) -> (i32, i32) {
    %c0_i32 = arith.constant 0 : i32
    %c0_i32_0 = arith.constant 0 : i32
    return %c0_i32, %arg1 : i32, i32
  }
  func.func @transform_3(%arg0: i32, %arg1: i32) -> (i32, i32) {
    %c0_i32 = arith.constant 0 : i32
    %c0_i32_0 = arith.constant 0 : i32
    return %arg1, %c0_i32 : i32, i32
  }
  func.func @transform_4(%arg0: i32, %arg1: i32) -> (i32, i32) {
    %c0_i32 = arith.constant 0 : i32
    %c0_i32_0 = arith.constant 0 : i32
    %c0_i32_1 = arith.constant 0 : i32
    return %c0_i32, %c0_i32_0 : i32, i32
  }
  func.func @transform_5(%arg0: i32, %arg1: i32) -> (i32, i32) {
    %c0_i32 = arith.constant 0 : i32
    %c0_i32_0 = arith.constant 0 : i32
    return %arg0, %c0_i32 : i32, i32
  }
}

module attributes {stable_mosaic.version = 11 : i64} {
  func.func @_ff_kernel(%arg0: i32, %arg1: i32, %arg2: memref<16x128xf32, #tpu.memory_space<vmem>>, %arg3: memref<128x128xbf16, #tpu.memory_space<vmem>>, %arg4: memref<1x128xf32, #tpu.memory_space<vmem>>, %arg5: memref<128x128xbf16, #tpu.memory_space<vmem>>, %arg6: memref<1x128xf32, #tpu.memory_space<vmem>>, %arg7: memref<16x128xf32, #tpu.memory_space<vmem>>, %arg8: memref<16x128xbf16, #tpu.memory_space<vmem>>, %arg9: memref<16x128xf32, #tpu.memory_space<vmem>>) attributes {dimension_semantics = [#tpu.dimension_semantics<parallel>, #tpu.dimension_semantics<arbitrary>], iteration_bounds = array<i64: 1, 1>, scalar_prefetch = 0 : i64, scratch_operands = 2 : i64, tpu.core_type = #tpu.core_type<tc>, window_params = [{transform_indices = @transform_0, window_bounds = array<i64: 16, 128>}, {transform_indices = @transform_1, window_bounds = array<i64: 128, 128>}, {transform_indices = @transform_2, window_bounds = array<i64: 1, 128>}, {transform_indices = @transform_3, window_bounds = array<i64: 128, 128>}, {pipeline_mode = #tpu.pipeline_mode<synchronous>, transform_indices = @transform_4, window_bounds = array<i64: 1, 128>}, {transform_indices = @transform_5, window_bounds = array<i64: 16, 128>}]} {
    %c0_i32 = arith.constant 0 : i32
    %0 = arith.cmpi eq, %arg1, %c0_i32 : i32
    %1 = arith.extui %0 : i1 to i32
    %c0_i32_0 = arith.constant 0 : i32
    %2 = arith.cmpi ne, %1, %c0_i32_0 : i32
    scf.if %2 {
      %c0_19 = arith.constant 0 : index
      %c0_20 = arith.constant 0 : index
      %31 = vector.load %arg2[%c0_19, %c0_20] : memref<16x128xf32, #tpu.memory_space<vmem>>, vector<16x128xf32>
      %cst_21 = arith.constant dense<0.000000e+00> : vector<16xf32>
      %32 = vector.multi_reduction <add>, %31, %cst_21 [1] : vector<16x128xf32> to vector<16xf32>
      %33 = vector.shape_cast %32 : vector<16xf32> to vector<16x1xf32>
      %cst_22 = arith.constant 3.125000e-02 : f32
      %34 = vector.broadcast %cst_22 : f32 to vector<16x1xf32>
      %35 = arith.mulf %33, %34 : vector<16x1xf32>
      %36 = arith.mulf %31, %31 : vector<16x128xf32>
      %cst_23 = arith.constant dense<0.000000e+00> : vector<16xf32>
      %37 = vector.multi_reduction <add>, %36, %cst_23 [1] : vector<16x128xf32> to vector<16xf32>
      %38 = vector.shape_cast %37 : vector<16xf32> to vector<16x1xf32>
      %cst_24 = arith.constant 3.125000e-02 : f32
      %39 = vector.broadcast %cst_24 : f32 to vector<16x1xf32>
      %40 = arith.mulf %38, %39 : vector<16x1xf32>
      %41 = arith.mulf %35, %35 : vector<16x1xf32>
      %42 = arith.subf %40, %41 : vector<16x1xf32>
      %cst_25 = arith.constant 0.000000e+00 : f32
      %43 = vector.broadcast %cst_25 : f32 to vector<16x1xf32>
      %44 = arith.maximumf %42, %43 : vector<16x1xf32>
      %45 = vector.broadcast %35 : vector<16x1xf32> to vector<16x128xf32>
      %46 = arith.subf %31, %45 : vector<16x128xf32>
      %cst_26 = arith.constant 9.99999974E-6 : f32
      %47 = vector.broadcast %cst_26 : f32 to vector<16x1xf32>
      %48 = arith.addf %44, %47 : vector<16x1xf32>
      %49 = math.rsqrt %48 : vector<16x1xf32>
      %50 = vector.broadcast %49 : vector<16x1xf32> to vector<16x128xf32>
      %51 = arith.mulf %46, %50 : vector<16x128xf32>
      %52 = arith.truncf %51 : vector<16x128xf32> to vector<16x128xbf16>
      %c0_27 = arith.constant 0 : index
      %c0_28 = arith.constant 0 : index
      %53 = vector.load %arg8[%c0_27, %c0_28] : memref<16x128xbf16, #tpu.memory_space<vmem>>, vector<16x128xbf16>
      tpu.vector_store %arg8[%c0_27, %c0_28], %52 {strides = array<i32>} : memref<16x128xbf16, #tpu.memory_space<vmem>>, vector<16x128xbf16>,
      %cst_29 = arith.constant 0.000000e+00 : f32
      %54 = vector.broadcast %cst_29 : f32 to vector<16x128xf32>
      %c0_30 = arith.constant 0 : index
      %c0_31 = arith.constant 0 : index
      %55 = vector.load %arg9[%c0_30, %c0_31] : memref<16x128xf32, #tpu.memory_space<vmem>>, vector<16x128xf32>
      tpu.vector_store %arg9[%c0_30, %c0_31], %54 {strides = array<i32>} : memref<16x128xf32, #tpu.memory_space<vmem>>, vector<16x128xf32>,
    } else {
    }
    %c0 = arith.constant 0 : index
    %c0_1 = arith.constant 0 : index
    %3 = vector.load %arg8[%c0, %c0_1] : memref<16x128xbf16, #tpu.memory_space<vmem>>, vector<16x128xbf16>
    %c0_2 = arith.constant 0 : index
    %c0_3 = arith.constant 0 : index
    %4 = vector.load %arg3[%c0_2, %c0_3] : memref<128x128xbf16, #tpu.memory_space<vmem>>, vector<128x128xbf16>
    %cst = arith.constant dense<0.000000e+00> : vector<16x128xf32>
    %5 = tpu.matmul %3, %4, %cst {dimension_numbers = #tpu.dot_dimension_numbers<[1], [0], [0], [1], [0, 0, 1, 1], [], []>} : vector<16x128xbf16>, vector<128x128xbf16>, vector<16x128xf32> -> vector<16x128xf32>
    %c0_4 = arith.constant 0 : index
    %c0_5 = arith.constant 0 : index
    %6 = vector.load %arg4[%c0_4, %c0_5] : memref<1x128xf32, #tpu.memory_space<vmem>>, vector<1x128xf32>
    %7 = vector.broadcast %6 : vector<1x128xf32> to vector<16x128xf32>
    %8 = arith.addf %5, %7 : vector<16x128xf32>
    %9 = arith.truncf %8 : vector<16x128xf32> to vector<16x128xbf16>
    %cst_6 = arith.constant 5.000000e-01 : bf16
    %10 = vector.broadcast %cst_6 : bf16 to vector<16x128xbf16>
    %11 = arith.mulf %10, %9 : vector<16x128xbf16>
    %12 = arith.mulf %9, %9 : vector<16x128xbf16>
    %13 = arith.mulf %12, %9 : vector<16x128xbf16>
    %cst_7 = arith.constant 4.467770e-02 : bf16
    %14 = vector.broadcast %cst_7 : bf16 to vector<16x128xbf16>
    %15 = arith.mulf %14, %13 : vector<16x128xbf16>
    %16 = arith.addf %9, %15 : vector<16x128xbf16>
    %cst_8 = arith.constant 7.968750e-01 : bf16
    %17 = vector.broadcast %cst_8 : bf16 to vector<16x128xbf16>
    %18 = arith.mulf %17, %16 : vector<16x128xbf16>
    %19 = math.tanh %18 : vector<16x128xbf16>
    %cst_9 = arith.constant 1.000000e+00 : bf16
    %20 = vector.broadcast %cst_9 : bf16 to vector<16x128xbf16>
    %21 = arith.addf %20, %19 : vector<16x128xbf16>
    %22 = arith.mulf %11, %21 : vector<16x128xbf16>
    %c0_10 = arith.constant 0 : index
    %c0_11 = arith.constant 0 : index
    %23 = vector.load %arg9[%c0_10, %c0_11] : memref<16x128xf32, #tpu.memory_space<vmem>>, vector<16x128xf32>
    %c0_12 = arith.constant 0 : index
    %c0_13 = arith.constant 0 : index
    %24 = vector.load %arg5[%c0_12, %c0_13] : memref<128x128xbf16, #tpu.memory_space<vmem>>, vector<128x128xbf16>
    %cst_14 = arith.constant dense<0.000000e+00> : vector<16x128xf32>
    %25 = tpu.matmul %22, %24, %cst_14 {dimension_numbers = #tpu.dot_dimension_numbers<[1], [0], [0], [1], [0, 0, 1, 1], [], []>} : vector<16x128xbf16>, vector<128x128xbf16>, vector<16x128xf32> -> vector<16x128xf32>
    %26 = arith.addf %23, %25 : vector<16x128xf32>
    %c0_15 = arith.constant 0 : index
    %c0_16 = arith.constant 0 : index
    %27 = vector.load %arg9[%c0_15, %c0_16] : memref<16x128xf32, #tpu.memory_space<vmem>>, vector<16x128xf32>
    tpu.vector_store %arg9[%c0_15, %c0_16], %26 {strides = array<i32>} : memref<16x128xf32, #tpu.memory_space<vmem>>, vector<16x128xf32>,
    %c0_i32_17 = arith.constant 0 : i32
    %28 = arith.cmpi eq, %arg1, %c0_i32_17 : i32
    %29 = arith.extui %28 : i1 to i32
    %c0_i32_18 = arith.constant 0 : i32
    %30 = arith.cmpi ne, %29, %c0_i32_18 : i32
    scf.if %30 {
      %c0_19 = arith.constant 0 : index
      %c0_20 = arith.constant 0 : index
      %31 = vector.load %arg9[%c0_19, %c0_20] : memref<16x128xf32, #tpu.memory_space<vmem>>, vector<16x128xf32>
      %c0_21 = arith.constant 0 : index
      %c0_22 = arith.constant 0 : index
      %32 = vector.load %arg6[%c0_21, %c0_22] : memref<1x128xf32, #tpu.memory_space<vmem>>, vector<1x128xf32>
      %33 = vector.broadcast %32 : vector<1x128xf32> to vector<16x128xf32>
      %34 = arith.addf %31, %33 : vector<16x128xf32>
      %c0_23 = arith.constant 0 : index
      %c0_24 = arith.constant 0 : index
      %35 = vector.load %arg7[%c0_23, %c0_24] : memref<16x128xf32, #tpu.memory_space<vmem>>, vector<16x128xf32>
      tpu.vector_store %arg7[%c0_23, %c0_24], %34 {strides = array<i32>} : memref<16x128xf32, #tpu.memory_space<vmem>>, vector<16x128xf32>,
    } else {
    }
    return
  }
  func.func @transform_0(%arg0: i32, %arg1: i32) -> (i32, i32) {
    %c0_i32 = arith.constant 0 : i32
    %c0_i32_0 = arith.constant 0 : i32
    return %arg0, %c0_i32 : i32, i32
  }
  func.func @transform_1(%arg0: i32, %arg1: i32) -> (i32, i32) {
    %c0_i32 = arith.constant 0 : i32
    %c0_i32_0 = arith.constant 0 : i32
    return %c0_i32, %arg1 : i32, i32
  }
  func.func @transform_2(%arg0: i32, %arg1: i32) -> (i32, i32) {
    %c0_i32 = arith.constant 0 : i32
    %c0_i32_0 = arith.constant 0 : i32
    return %c0_i32, %arg1 : i32, i32
  }
  func.func @transform_3(%arg0: i32, %arg1: i32) -> (i32, i32) {
    %c0_i32 = arith.constant 0 : i32
    %c0_i32_0 = arith.constant 0 : i32
    return %arg1, %c0_i32 : i32, i32
  }
  func.func @transform_4(%arg0: i32, %arg1: i32) -> (i32, i32) {
    %c0_i32 = arith.constant 0 : i32
    %c0_i32_0 = arith.constant 0 : i32
    %c0_i32_1 = arith.constant 0 : i32
    return %c0_i32, %c0_i32_0 : i32, i32
  }
  func.func @transform_5(%arg0: i32, %arg1: i32) -> (i32, i32) {
    %c0_i32 = arith.constant 0 : i32
    %c0_i32_0 = arith.constant 0 : i32
    return %arg0, %c0_i32 : i32, i32
  }
}

</mosaic_0001>

<llo_original>
// kernel: _ff_impl.1
$region0: #{_ff_impl.1}
  #allocation0 [shape = 'u32[]', space=smem, size = 0x4, offset = 0x4, fixed_abs, tag = 'smem constant byte address 0x4 - core index']
  #allocation1 [shape = 'u32[144,128]{1,0:T(1,128)}', space=vmem, size = 0x12000, scoped, tag = 'internal scratch']
  #allocation2 [shape = 'bf16[16,128]{1,0:T(16,128)(2,1)}', space=vmem, size = 0x1000, scoped, tag = 'scratch operand']
  #allocation3 [shape = 'f32[16,128]{1,0:T(8,128)}', space=vmem, size = 0x2000, scoped, tag = 'scratch operand']
  %s0 = inlined_call_operand.vmem [shape: f32[16,128], index: 0, kind: input, shape index: {}]
  %s1 = inlined_call_operand.hbm [shape: bf16[128,128], index: 1, kind: input, shape index: {}]
  %s2 = inlined_call_operand.vmem [shape: f32[1,128], index: 2, kind: input, shape index: {}]
  %s3 = inlined_call_operand.hbm [shape: bf16[128,128], index: 3, kind: input, shape index: {}]
  %s4 = inlined_call_operand.vmem [shape: f32[1,128], index: 4, kind: input, shape index: {}]
  %s5 = inlined_call_operand.vmem [shape: f32[16,128], index: 5, kind: output, shape index: {}]
  %s6 = sld [smem:[#allocation0]]
  $region46: #{_ff_impl.1} parent=0
    _
  %s8 = ssub.s32 1, %s6
  %s9 = scalar_select 0, %s8, %s6
  $region1: #{_ff_impl.1} parent=0
    #allocation4 [shape = 'u8[32768]{0}', space=vmem, size = 0x8000, scoped, tag = 'input window, operand 1, single buffered']
    #allocation5 [shape = 's32[1]{0}', space=sflag, size = 0x4, scoped, tag = 'scoped memory for _ff_impl.1']
    #allocation6 [shape = 'u8[32768]{0}', space=vmem, size = 0x8000, scoped, tag = 'input window, operand 3, single buffered']
    #allocation7 [shape = 's32[1]{0}', space=sflag, size = 0x4, scoped, tag = 'scoped memory for _ff_impl.1']
    %10 = vsyncpa [#allocation5], 0
    %11 = vsyncpa [#allocation7], 0
    // Predicated region
    $region2: #{_ff_impl.1} parent=1 // pred_check
      _
    $region3: #{_ff_impl.1} parent=1 // pred_check_branch
      %13 = sbr.rel (0) target = $region5
    $region4: #{_ff_impl.1} parent=1 // pred_region
      _
    $region5: #{_ff_impl.1} parent=1 // pred_fallthru
      _
    // Predicated region
    $region6: #{_ff_impl.1} parent=1 // pred_check
      _
    $region7: #{_ff_impl.1} parent=1 // pred_check_branch
      %15 = sbr.rel (0) target = $region9
    $region8: #{_ff_impl.1} parent=1 // pred_region
      %s17 = ssub.s32 1024, 1024
      %18 = vsyncadd [#allocation5], %s17
      %s19 = sshll.u32 [#allocation4], 4
      %s20 = int_to_ptr.vmem [resolvable:$true] %s19
      %25 = dma.hbm_to_vmem [thread:$0]  %s1, 1024, %s20, [#allocation5], 64, 64, 4
    $region9: #{_ff_impl.1} parent=1 // pred_fallthru
      _
    // Predicated region
    $region10: #{_ff_impl.1} parent=1 // pred_check
      _
    $region11: #{_ff_impl.1} parent=1 // pred_check_branch
      %27 = sbr.rel (0) target = $region13
    $region12: #{_ff_impl.1} parent=1 // pred_region
      _
    $region13: #{_ff_impl.1} parent=1 // pred_fallthru
      _
    // Predicated region
    $region14: #{_ff_impl.1} parent=1 // pred_check
      _
    $region15: #{_ff_impl.1} parent=1 // pred_check_branch
      %29 = sbr.rel (0) target = $region17
    $region16: #{_ff_impl.1} parent=1 // pred_region
      %s31 = ssub.s32 1024, 1024
      %32 = vsyncadd [#allocation7], %s31
      %s33 = sshll.u32 [#allocation6], 4
      %s34 = int_to_ptr.vmem [resolvable:$true] %s33
      %39 = dma.hbm_to_vmem [thread:$0]  %s3, 1024, %s34, [#allocation7], 64, 64, 4
    $region17: #{_ff_impl.1} parent=1 // pred_fallthru
      _
    // Predicated region
    $region18: #{_ff_impl.1} parent=1 // pred_check
      _
    $region19: #{_ff_impl.1} parent=1 // pred_check_branch
      %41 = sbr.rel (0) target = $region21
    $region20: #{_ff_impl.1} parent=1 // pred_region
      _
    $region21: #{_ff_impl.1} parent=1 // pred_fallthru
      _
    // Predicated region
    $region22: #{_ff_impl.1} parent=1 // pred_check
      _
    $region23: #{_ff_impl.1} parent=1 // pred_check_branch
      %43 = sbr.rel (0) target = $region25
    $region24: #{_ff_impl.1} parent=1 // pred_region
      %44 = dma.done [#allocation5], 1024
    $region25: #{_ff_impl.1} parent=1 // pred_fallthru
      _
    // Predicated region
    $region26: #{_ff_impl.1} parent=1 // pred_check
      _
    $region27: #{_ff_impl.1} parent=1 // pred_check_branch
      %46 = sbr.rel (0) target = $region29
    $region28: #{_ff_impl.1} parent=1 // pred_region
      %47 = dma.done [#allocation7], 1024
    $region29: #{_ff_impl.1} parent=1 // pred_fallthru
      _
    %p53 = scmp.eq.s32.totalorder 0, 0
    // Predicated region
    $region30: #{_ff_impl.1} parent=1 // pred_check
      %p54 = pneg %p53
    $region31: #{_ff_impl.1} parent=1 // pred_check_branch
      %56 = sbr.rel (%p54) target = $region33
    $region32: #{_ff_impl.1} parent=1 // pred_region
      %v57 = vld [vmem:[%s0] sm:$0xff]
      %v58 = vld [vmem:[%s0 + $0x8] sm:$0xff]
      %59 = vadd.xlane.f32.xlu0 %v57
      %v60 = vpop.xlane.xlu0 %59
      %61 = vadd.xlane.f32.xlu0 %v58
      %v62 = vpop.xlane.xlu0 %61
      %v63 = vmul.f32 %v60, 0.03125
      %v64 = vmul.f32 %v62, 0.03125
      %v65 = vmul.f32 %v57, %v57
      %v66 = vmul.f32 %v58, %v58
      %67 = vadd.xlane.f32.xlu0 %v65
      %v68 = vpop.xlane.xlu0 %67
      %69 = vadd.xlane.f32.xlu0 %v66
      %v70 = vpop.xlane.xlu0 %69
      %v71 = vmul.f32 %v68, 0.03125
      %v72 = vmul.f32 %v70, 0.03125
      %v73 = vmul.f32 %v63, %v63
      %v74 = vmul.f32 %v64, %v64
      %v75 = vsub.f32 %v71, %v73
      %v76 = vsub.f32 %v72, %v74
      %v77 = vmax.f32 %v75, 0.0
      %v78 = vmax.f32 %v76, 0.0
      %v79 = vsub.f32 %v57, %v63
      %v80 = vsub.f32 %v58, %v64
      %v81 = vadd.f32 %v77, 1e-05
      %v82 = vadd.f32 %v78, 1e-05
      %v83 = vrsqrt.pop %v81
      %v84 = vrsqrt.pop %v82
      %v85 = vmul.f32 %v79, %v83
      %v86 = vmul.f32 %v80, %v84
      %v87 = vpack.c.bf16 %v86, %v85
      %88 = vst [vmem:[#allocation2] sm:$0xff] %v87
      %89 = vst [vmem:[#allocation3] sm:$0xff] 0.0
      %90 = vst [vmem:[#allocation3 + $0x8] sm:$0xff] 0.0
    $region33: #{_ff_impl.1} parent=1 // pred_fallthru
      _
    %v91 = vld [vmem:[#allocation2] sm:$0xff]
    %v92 = vld [vmem:[#allocation4] sm:$0xf]
    %v93 = vld [vmem:[#allocation4 + $0x4] sm:$0xf]
    %v94 = vld [vmem:[#allocation4 + $0x8] sm:$0xf]
    %v95 = vld [vmem:[#allocation4 + $0xc] sm:$0xf]
    %v96 = vld [vmem:[#allocation4 + $0x10] sm:$0xf]
    %v97 = vld [vmem:[#allocation4 + $0x14] sm:$0xf]
    %v98 = vld [vmem:[#allocation4 + $0x18] sm:$0xf]
    %v99 = vld [vmem:[#allocation4 + $0x1c] sm:$0xf]
    %v100 = vld [vmem:[#allocation4 + $0x20] sm:$0xf]
    %v101 = vld [vmem:[#allocation4 + $0x24] sm:$0xf]
    %v102 = vld [vmem:[#allocation4 + $0x28] sm:$0xf]
    %v103 = vld [vmem:[#allocation4 + $0x2c] sm:$0xf]
    %v104 = vld [vmem:[#allocation4 + $0x30] sm:$0xf]
    %v105 = vld [vmem:[#allocation4 + $0x34] sm:$0xf]
    %v106 = vld [vmem:[#allocation4 + $0x38] sm:$0xf]
    %v107 = vld [vmem:[#allocation4 + $0x3c] sm:$0xf]
    %v108 = vld [vmem:[%s2] sm:$0x1]
    %v110 = vlaneseq
    %v111 = vshrl.u32 %v110, 7
    %v112 = vsub.s32 0, %v111
    %v113 = vrot.slane %v108, %v112
    %v131 = vunpack.c.l.b16 %v92
    %v132 = vunpack.c.l.b16 %v93
    %v133 = vunpack.c.l.b16 %v94
    %v134 = vunpack.c.l.b16 %v95
    %v135 = vunpack.c.l.b16 %v96
    %v136 = vunpack.c.l.b16 %v97
    %v137 = vunpack.c.l.b16 %v98
    %v138 = vunpack.c.l.b16 %v99
    %v139 = vunpack.c.l.b16 %v100
    %v140 = vunpack.c.l.b16 %v101
    %v141 = vunpack.c.l.b16 %v102
    %v142 = vunpack.c.l.b16 %v103
    %v143 = vunpack.c.l.b16 %v104
    %v144 = vunpack.c.l.b16 %v105
    %v145 = vunpack.c.l.b16 %v106
    %v146 = vunpack.c.l.b16 %v107
    %v147 = vpack.c.b16 %v132, %v131
    %v148 = vpack.c.b16 %v134, %v133
    %v149 = vpack.c.b16 %v136, %v135
    %v150 = vpack.c.b16 %v138, %v137
    %v151 = vpack.c.b16 %v140, %v139
    %v152 = vpack.c.b16 %v142, %v141
    %v153 = vpack.c.b16 %v144, %v143
    %v154 = vpack.c.b16 %v146, %v145
    %163 = vmatprep.subr.bf16.mxu0 0
    %164 = vmatpush1.bf16.msra.mxu0 %v147
    %165 = vmatprep.subr.bf16.mxu0 0
    %166 = vmatpush1.bf16.msra.mxu0 %v148
    %167 = vmatprep.subr.bf16.mxu0 0
    %168 = vmatpush1.bf16.msra.mxu0 %v149
    %169 = vmatprep.subr.bf16.mxu0 0
    %170 = vmatpush1.bf16.msra.mxu0 %v150
    %171 = vmatprep.subr.bf16.mxu0 0
    %172 = vmatpush1.bf16.msra.mxu0 %v151
    %173 = vmatprep.subr.bf16.mxu0 0
    %174 = vmatpush1.bf16.msra.mxu0 %v152
    %175 = vmatprep.subr.bf16.mxu0 0
    %176 = vmatpush1.bf16.msra.mxu0 %v153
    %177 = vmatprep.subr.bf16.mxu0 0
    %178 = vmatpush1.bf16.msra.mxu0 %v154
    %179 = vmatprep.subr.bf16.mxu0 0
    %180 = vmatpush1.bf16.msra.mxu0 0
    %181 = vmatprep.subr.bf16.mxu0 0
    %182 = vmatpush1.bf16.msra.mxu0 0
    %183 = vmatprep.subr.bf16.mxu0 0
    %184 = vmatpush1.bf16.msra.mxu0 0
    %185 = vmatprep.subr.bf16.mxu0 0
    %186 = vmatpush1.bf16.msra.mxu0 0
    %187 = vmatprep.subr.bf16.mxu0 0
    %188 = vmatpush1.bf16.msra.mxu0 0
    %189 = vmatprep.subr.bf16.mxu0 0
    %190 = vmatpush1.bf16.msra.mxu0 0
    %191 = vmatprep.subr.bf16.mxu0 0
    %192 = vmatpush1.bf16.msra.mxu0 0
    %193 = vmatprep.subr.bf16.mxu0 0
    %194 = vmatpush1.bf16.msra.mxu0 0
    %195 = vmatprep.mubr.bf16.mxu0 0
    %196 = vmatmul.mubr.bf16.gmra.mrb[0].mxu0 %v91
    %v197 = vpop.f32.mrb[0].mxu0
    %v198 = vadd.f32 %v113, %v197
    %v199 = vpop.f32.mrb[0].mxu0
    %v200 = vpop.f32.mrb[0].mxu0
    %v201 = vadd.f32 %v113, %v200
    %v202 = vpop.f32.mrb[0].mxu0
    %203 = vdwg.mxu0
    %v204 = vpack.c.bf16 %v201, %v198
    %v205 = vmul.bf16 %v204, 1056980736
    %v206 = vmul.bf16 %v204, %v204
    %v207 = vmul.bf16 %v206, %v204
    %v208 = vmul.bf16 %v207, 1027030327
    %v209 = vadd.bf16 %v204, %v208
    %v210 = vmul.bf16 %v209, 1061961548
    %v211 = vtanh.bf16.pop %v210
    %v212 = vadd.bf16 %v211, 1065369472
    %v213 = vmul.bf16 %v205, %v212
    %v214 = vld [vmem:[#allocation3] sm:$0xff]
    %v215 = vld [vmem:[#allocation3 + $0x8] sm:$0xff]
    %v216 = vld [vmem:[#allocation6] sm:$0xf]
    %v217 = vld [vmem:[#allocation6 + $0x4] sm:$0xf]
    %v218 = vld [vmem:[#allocation6 + $0x8] sm:$0xf]
    %v219 = vld [vmem:[#allocation6 + $0xc] sm:$0xf]
    %v220 = vld [vmem:[#allocation6 + $0x10] sm:$0xf]
    %v221 = vld [vmem:[#allocation6 + $0x14] sm:$0xf]
    %v222 = vld [vmem:[#allocation6 + $0x18] sm:$0xf]
    %v223 = vld [vmem:[#allocation6 + $0x1c] sm:$0xf]
    %v224 = vld [vmem:[#allocation6 + $0x20] sm:$0xf]
    %v225 = vld [vmem:[#allocation6 + $0x24] sm:$0xf]
    %v226 = vld [vmem:[#allocation6 + $0x28] sm:$0xf]
    %v227 = vld [vmem:[#allocation6 + $0x2c] sm:$0xf]
    %v228 = vld [vmem:[#allocation6 + $0x30] sm:$0xf]
    %v229 = vld [vmem:[#allocation6 + $0x34] sm:$0xf]
    %v230 = vld [vmem:[#allocation6 + $0x38] sm:$0xf]
    %v231 = vld [vmem:[#allocation6 + $0x3c] sm:$0xf]
    %v248 = vunpack.c.l.b16 %v216
    %v249 = vunpack.c.l.b16 %v217
    %v250 = vunpack.c.l.b16 %v218
    %v251 = vunpack.c.l.b16 %v219
    %v252 = vunpack.c.l.b16 %v220
    %v253 = vunpack.c.l.b16 %v221
    %v254 = vunpack.c.l.b16 %v222
    %v255 = vunpack.c.l.b16 %v223
    %v256 = vunpack.c.l.b16 %v224
    %v257 = vunpack.c.l.b16 %v225
    %v258 = vunpack.c.l.b16 %v226
    %v259 = vunpack.c.l.b16 %v227
    %v260 = vunpack.c.l.b16 %v228
    %v261 = vunpack.c.l.b16 %v229
    %v262 = vunpack.c.l.b16 %v230
    %v263 = vunpack.c.l.b16 %v231
    %v264 = vpack.c.b16 %v249, %v248
    %v265 = vpack.c.b16 %v251, %v250
    %v266 = vpack.c.b16 %v253, %v252
    %v267 = vpack.c.b16 %v255, %v254
    %v268 = vpack.c.b16 %v257, %v256
    %v269 = vpack.c.b16 %v259, %v258
    %v270 = vpack.c.b16 %v261, %v260
    %v271 = vpack.c.b16 %v263, %v262
    %280 = vmatprep.subr.bf16.mxu0 0
    %281 = vmatpush1.bf16.msra.mxu0 %v264
    %282 = vmatprep.subr.bf16.mxu0 0
    %283 = vmatpush1.bf16.msra.mxu0 %v265
    %284 = vmatprep.subr.bf16.mxu0 0
    %285 = vmatpush1.bf16.msra.mxu0 %v266
    %286 = vmatprep.subr.bf16.mxu0 0
    %287 = vmatpush1.bf16.msra.mxu0 %v267
    %288 = vmatprep.subr.bf16.mxu0 0
    %289 = vmatpush1.bf16.msra.mxu0 %v268
    %290 = vmatprep.subr.bf16.mxu0 0
    %291 = vmatpush1.bf16.msra.mxu0 %v269
    %292 = vmatprep.subr.bf16.mxu0 0
    %293 = vmatpush1.bf16.msra.mxu0 %v270
    %294 = vmatprep.subr.bf16.mxu0 0
    %295 = vmatpush1.bf16.msra.mxu0 %v271
    %296 = vmatprep.subr.bf16.mxu0 0
    %297 = vmatpush1.bf16.msra.mxu0 0
    %298 = vmatprep.subr.bf16.mxu0 0
    %299 = vmatpush1.bf16.msra.mxu0 0
    %300 = vmatprep.subr.bf16.mxu0 0
    %301 = vmatpush1.bf16.msra.mxu0 0
    %302 = vmatprep.subr.bf16.mxu0 0
    %303 = vmatpush1.bf16.msra.mxu0 0
    %304 = vmatprep.subr.bf16.mxu0 0
    %305 = vmatpush1.bf16.msra.mxu0 0
    %306 = vmatprep.subr.bf16.mxu0 0
    %307 = vmatpush1.bf16.msra.mxu0 0
    %308 = vmatprep.subr.bf16.mxu0 0
    %309 = vmatpush1.bf16.msra.mxu0 0
    %310 = vmatprep.subr.bf16.mxu0 0
    %311 = vmatpush1.bf16.msra.mxu0 0
    %312 = vmatprep.mubr.bf16.mxu0 0
    %313 = vmatmul.mubr.bf16.gmra.mrb[0].mxu0 %v213
    %v314 = vpop.f32.mrb[0].mxu0
    %v315 = vadd.f32 0.0, %v314
    %v316 = vpop.f32.mrb[0].mxu0
    %v317 = vpop.f32.mrb[0].mxu0
    %v318 = vadd.f32 0.0, %v317
    %v319 = vpop.f32.mrb[0].mxu0
    %320 = vdwg.mxu0
    %v321 = vadd.f32 %v214, %v315
    %v322 = vadd.f32 %v215, %v318
    %323 = vst [vmem:[#allocation3] sm:$0xff] %v321
    %324 = vst [vmem:[#allocation3 + $0x8] sm:$0xff] %v322
    // Predicated region
    $region34: #{_ff_impl.1} parent=1 // pred_check
      %p325 = pneg %p53
    $region35: #{_ff_impl.1} parent=1 // pred_check_branch
      %327 = sbr.rel (%p325) target = $region37
    $region36: #{_ff_impl.1} parent=1 // pred_region
      %v328 = vld [vmem:[#allocation3] sm:$0xff]
      %v329 = vld [vmem:[#allocation3 + $0x8] sm:$0xff]
      %v330 = vld [vmem:[%s4] sm:$0x1]
      %v332 = vlaneseq
      %v333 = vshrl.u32 %v332, 7
      %v334 = vsub.s32 0, %v333
      %v335 = vrot.slane %v330, %v334
      %v337 = vadd.f32 %v328, %v335
      %v338 = vadd.f32 %v329, %v335
      %339 = vst [vmem:[%s5] sm:$0xff] %v337
      %340 = vst [vmem:[%s5 + $0x8] sm:$0xff] %v338
    $region37: #{_ff_impl.1} parent=1 // pred_fallthru
      _
    // Predicated region
    $region38: #{_ff_impl.1} parent=1 // pred_check
      _
    $region39: #{_ff_impl.1} parent=1 // pred_check_branch
      %342 = sbr.rel (0) target = $region41
    $region40: #{_ff_impl.1} parent=1 // pred_region
      _
    $region41: #{_ff_impl.1} parent=1 // pred_fallthru
      _
    // Predicated region
    $region42: #{_ff_impl.1} parent=1 // pred_check
      _
    $region43: #{_ff_impl.1} parent=1 // pred_check_branch
      %344 = sbr.rel (0) target = $region45
    $region44: #{_ff_impl.1} parent=1 // pred_region
      _
    $region45: #{_ff_impl.1} parent=1 // pred_fallthru
      _
    %345 = vsyncpa [#allocation5], 1
    %346 = vsyncpa [#allocation7], 1

// kernel: _ff_impl.1
$region0: #{_ff_impl.1}
  #allocation0 [shape = 'u32[]', space=smem, size = 0x4, offset = 0x4, fixed_abs, tag = 'smem constant byte address 0x4 - core index']
  #allocation1 [shape = 'u32[144,128]{1,0:T(1,128)}', space=vmem, size = 0x12000, scoped, tag = 'internal scratch']
  #allocation2 [shape = 'bf16[16,128]{1,0:T(16,128)(2,1)}', space=vmem, size = 0x1000, scoped, tag = 'scratch operand']
  #allocation3 [shape = 'f32[16,128]{1,0:T(8,128)}', space=vmem, size = 0x2000, scoped, tag = 'scratch operand']
  %s0 = inlined_call_operand.vmem [shape: f32[16,128], index: 0, kind: input, shape index: {}]
  %s1 = inlined_call_operand.hbm [shape: bf16[128,128], index: 1, kind: input, shape index: {}]
  %s2 = inlined_call_operand.vmem [shape: f32[1,128], index: 2, kind: input, shape index: {}]
  %s3 = inlined_call_operand.hbm [shape: bf16[128,128], index: 3, kind: input, shape index: {}]
  %s4 = inlined_call_operand.vmem [shape: f32[1,128], index: 4, kind: input, shape index: {}]
  %s5 = inlined_call_operand.vmem [shape: f32[16,128], index: 5, kind: output, shape index: {}]
  %s6 = sld [smem:[#allocation0]]
  $region46: #{_ff_impl.1} parent=0
    _
  %s8 = ssub.s32 1, %s6
  %s9 = scalar_select 0, %s8, %s6
  $region1: #{_ff_impl.1} parent=0
    #allocation4 [shape = 'u8[32768]{0}', space=vmem, size = 0x8000, scoped, tag = 'input window, operand 1, single buffered']
    #allocation5 [shape = 's32[1]{0}', space=sflag, size = 0x4, scoped, tag = 'scoped memory for _ff_impl.1']
    #allocation6 [shape = 'u8[32768]{0}', space=vmem, size = 0x8000, scoped, tag = 'input window, operand 3, single buffered']
    #allocation7 [shape = 's32[1]{0}', space=sflag, size = 0x4, scoped, tag = 'scoped memory for _ff_impl.1']
    %10 = vsyncpa [#allocation5], 0
    %11 = vsyncpa [#allocation7], 0
    // Predicated region
    $region2: #{_ff_impl.1} parent=1 // pred_check
      _
    $region3: #{_ff_impl.1} parent=1 // pred_check_branch
      %13 = sbr.rel (0) target = $region5
    $region4: #{_ff_impl.1} parent=1 // pred_region
      _
    $region5: #{_ff_impl.1} parent=1 // pred_fallthru
      _
    // Predicated region
    $region6: #{_ff_impl.1} parent=1 // pred_check
      _
    $region7: #{_ff_impl.1} parent=1 // pred_check_branch
      %15 = sbr.rel (0) target = $region9
    $region8: #{_ff_impl.1} parent=1 // pred_region
      %s17 = ssub.s32 1024, 1024
      %18 = vsyncadd [#allocation5], %s17
      %s19 = sshll.u32 [#allocation4], 4
      %s20 = int_to_ptr.vmem [resolvable:$true] %s19
      %25 = dma.hbm_to_vmem [thread:$0]  %s1, 1024, %s20, [#allocation5], 64, 64, 4
    $region9: #{_ff_impl.1} parent=1 // pred_fallthru
      _
    // Predicated region
    $region10: #{_ff_impl.1} parent=1 // pred_check
      _
    $region11: #{_ff_impl.1} parent=1 // pred_check_branch
      %27 = sbr.rel (0) target = $region13
    $region12: #{_ff_impl.1} parent=1 // pred_region
      _
    $region13: #{_ff_impl.1} parent=1 // pred_fallthru
      _
    // Predicated region
    $region14: #{_ff_impl.1} parent=1 // pred_check
      _
    $region15: #{_ff_impl.1} parent=1 // pred_check_branch
      %29 = sbr.rel (0) target = $region17
    $region16: #{_ff_impl.1} parent=1 // pred_region
      %s31 = ssub.s32 1024, 1024
      %32 = vsyncadd [#allocation7], %s31
      %s33 = sshll.u32 [#allocation6], 4
      %s34 = int_to_ptr.vmem [resolvable:$true] %s33
      %39 = dma.hbm_to_vmem [thread:$0]  %s3, 1024, %s34, [#allocation7], 64, 64, 4
    $region17: #{_ff_impl.1} parent=1 // pred_fallthru
      _
    // Predicated region
    $region18: #{_ff_impl.1} parent=1 // pred_check
      _
    $region19: #{_ff_impl.1} parent=1 // pred_check_branch
      %41 = sbr.rel (0) target = $region21
    $region20: #{_ff_impl.1} parent=1 // pred_region
      _
    $region21: #{_ff_impl.1} parent=1 // pred_fallthru
      _
    // Predicated region
    $region22: #{_ff_impl.1} parent=1 // pred_check
      _
    $region23: #{_ff_impl.1} parent=1 // pred_check_branch
      %43 = sbr.rel (0) target = $region25
    $region24: #{_ff_impl.1} parent=1 // pred_region
      %44 = dma.done [#allocation5], 1024
    $region25: #{_ff_impl.1} parent=1 // pred_fallthru
      _
    // Predicated region
    $region26: #{_ff_impl.1} parent=1 // pred_check
      _
    $region27: #{_ff_impl.1} parent=1 // pred_check_branch
      %46 = sbr.rel (0) target = $region29
    $region28: #{_ff_impl.1} parent=1 // pred_region
      %47 = dma.done [#allocation7], 1024
    $region29: #{_ff_impl.1} parent=1 // pred_fallthru
      _
    %p53 = scmp.eq.s32.totalorder 0, 0
    // Predicated region
    $region30: #{_ff_impl.1} parent=1 // pred_check
      %p54 = pneg %p53
    $region31: #{_ff_impl.1} parent=1 // pred_check_branch
      %56 = sbr.rel (%p54) target = $region33
    $region32: #{_ff_impl.1} parent=1 // pred_region
      %v57 = vld [vmem:[%s0] sm:$0xff]
      %v58 = vld [vmem:[%s0 + $0x8] sm:$0xff]
      %59 = vadd.xlane.f32.xlu0 %v57
      %v60 = vpop.xlane.xlu0 %59
      %61 = vadd.xlane.f32.xlu0 %v58
      %v62 = vpop.xlane.xlu0 %61
      %v63 = vmul.f32 %v60, 0.03125
      %v64 = vmul.f32 %v62, 0.03125
      %v65 = vmul.f32 %v57, %v57
      %v66 = vmul.f32 %v58, %v58
      %67 = vadd.xlane.f32.xlu0 %v65
      %v68 = vpop.xlane.xlu0 %67
      %69 = vadd.xlane.f32.xlu0 %v66
      %v70 = vpop.xlane.xlu0 %69
      %v71 = vmul.f32 %v68, 0.03125
      %v72 = vmul.f32 %v70, 0.03125
      %v73 = vmul.f32 %v63, %v63
      %v74 = vmul.f32 %v64, %v64
      %v75 = vsub.f32 %v71, %v73
      %v76 = vsub.f32 %v72, %v74
      %v77 = vmax.f32 %v75, 0.0
      %v78 = vmax.f32 %v76, 0.0
      %v79 = vsub.f32 %v57, %v63
      %v80 = vsub.f32 %v58, %v64
      %v81 = vadd.f32 %v77, 1e-05
      %v82 = vadd.f32 %v78, 1e-05
      %v83 = vrsqrt.pop %v81
      %v84 = vrsqrt.pop %v82
      %v85 = vmul.f32 %v79, %v83
      %v86 = vmul.f32 %v80, %v84
      %v87 = vpack.c.bf16 %v86, %v85
      %88 = vst [vmem:[#allocation2] sm:$0xff] %v87
      %89 = vst [vmem:[#allocation3] sm:$0xff] 0.0
      %90 = vst [vmem:[#allocation3 + $0x8] sm:$0xff] 0.0
    $region33: #{_ff_impl.1} parent=1 // pred_fallthru
      _
    %v91 = vld [vmem:[#allocation2] sm:$0xff]
    %v92 = vld [vmem:[#allocation4] sm:$0xf]
    %v93 = vld [vmem:[#allocation4 + $0x4] sm:$0xf]
    %v94 = vld [vmem:[#allocation4 + $0x8] sm:$0xf]
    %v95 = vld [vmem:[#allocation4 + $0xc] sm:$0xf]
    %v96 = vld [vmem:[#allocation4 + $0x10] sm:$0xf]
    %v97 = vld [vmem:[#allocation4 + $0x14] sm:$0xf]
    %v98 = vld [vmem:[#allocation4 + $0x18] sm:$0xf]
    %v99 = vld [vmem:[#allocation4 + $0x1c] sm:$0xf]
    %v100 = vld [vmem:[#allocation4 + $0x20] sm:$0xf]
    %v101 = vld [vmem:[#allocation4 + $0x24] sm:$0xf]
    %v102 = vld [vmem:[#allocation4 + $0x28] sm:$0xf]
    %v103 = vld [vmem:[#allocation4 + $0x2c] sm:$0xf]
    %v104 = vld [vmem:[#allocation4 + $0x30] sm:$0xf]
    %v105 = vld [vmem:[#allocation4 + $0x34] sm:$0xf]
    %v106 = vld [vmem:[#allocation4 + $0x38] sm:$0xf]
    %v107 = vld [vmem:[#allocation4 + $0x3c] sm:$0xf]
    %v108 = vld [vmem:[%s2] sm:$0x1]
    %v110 = vlaneseq
    %v111 = vshrl.u32 %v110, 7
    %v112 = vsub.s32 0, %v111
    %v113 = vrot.slane %v108, %v112
    %v131 = vunpack.c.l.b16 %v92
    %v132 = vunpack.c.l.b16 %v93
    %v133 = vunpack.c.l.b16 %v94
    %v134 = vunpack.c.l.b16 %v95
    %v135 = vunpack.c.l.b16 %v96
    %v136 = vunpack.c.l.b16 %v97
    %v137 = vunpack.c.l.b16 %v98
    %v138 = vunpack.c.l.b16 %v99
    %v139 = vunpack.c.l.b16 %v100
    %v140 = vunpack.c.l.b16 %v101
    %v141 = vunpack.c.l.b16 %v102
    %v142 = vunpack.c.l.b16 %v103
    %v143 = vunpack.c.l.b16 %v104
    %v144 = vunpack.c.l.b16 %v105
    %v145 = vunpack.c.l.b16 %v106
    %v146 = vunpack.c.l.b16 %v107
    %v147 = vpack.c.b16 %v132, %v131
    %v148 = vpack.c.b16 %v134, %v133
    %v149 = vpack.c.b16 %v136, %v135
    %v150 = vpack.c.b16 %v138, %v137
    %v151 = vpack.c.b16 %v140, %v139
    %v152 = vpack.c.b16 %v142, %v141
    %v153 = vpack.c.b16 %v144, %v143
    %v154 = vpack.c.b16 %v146, %v145
    %163 = vmatprep.subr.bf16.mxu0 0
    %164 = vmatpush1.bf16.msra.mxu0 %v147
    %165 = vmatprep.subr.bf16.mxu0 0
    %166 = vmatpush1.bf16.msra.mxu0 %v148
    %167 = vmatprep.subr.bf16.mxu0 0
    %168 = vmatpush1.bf16.msra.mxu0 %v149
    %169 = vmatprep.subr.bf16.mxu0 0
    %170 = vmatpush1.bf16.msra.mxu0 %v150
    %171 = vmatprep.subr.bf16.mxu0 0
    %172 = vmatpush1.bf16.msra.mxu0 %v151
    %173 = vmatprep.subr.bf16.mxu0 0
    %174 = vmatpush1.bf16.msra.mxu0 %v152
    %175 = vmatprep.subr.bf16.mxu0 0
    %176 = vmatpush1.bf16.msra.mxu0 %v153
    %177 = vmatprep.subr.bf16.mxu0 0
    %178 = vmatpush1.bf16.msra.mxu0 %v154
    %179 = vmatprep.subr.bf16.mxu0 0
    %180 = vmatpush1.bf16.msra.mxu0 0
    %181 = vmatprep.subr.bf16.mxu0 0
    %182 = vmatpush1.bf16.msra.mxu0 0
    %183 = vmatprep.subr.bf16.mxu0 0
    %184 = vmatpush1.bf16.msra.mxu0 0
    %185 = vmatprep.subr.bf16.mxu0 0
    %186 = vmatpush1.bf16.msra.mxu0 0
    %187 = vmatprep.subr.bf16.mxu0 0
    %188 = vmatpush1.bf16.msra.mxu0 0
    %189 = vmatprep.subr.bf16.mxu0 0
    %190 = vmatpush1.bf16.msra.mxu0 0
    %191 = vmatprep.subr.bf16.mxu0 0
    %192 = vmatpush1.bf16.msra.mxu0 0
    %193 = vmatprep.subr.bf16.mxu0 0
    %194 = vmatpush1.bf16.msra.mxu0 0
    %195 = vmatprep.mubr.bf16.mxu0 0
    %196 = vmatmul.mubr.bf16.gmra.mrb[0].mxu0 %v91
    %v197 = vpop.f32.mrb[0].mxu0
    %v198 = vadd.f32 %v113, %v197
    %v199 = vpop.f32.mrb[0].mxu0
    %v200 = vpop.f32.mrb[0].mxu0
    %v201 = vadd.f32 %v113, %v200
    %v202 = vpop.f32.mrb[0].mxu0
    %203 = vdwg.mxu0
    %v204 = vpack.c.bf16 %v201, %v198
    %v205 = vmul.bf16 %v204, 1056980736
    %v206 = vmul.bf16 %v204, %v204
    %v207 = vmul.bf16 %v206, %v204
    %v208 = vmul.bf16 %v207, 1027030327
    %v209 = vadd.bf16 %v204, %v208
    %v210 = vmul.bf16 %v209, 1061961548
    %v211 = vtanh.bf16.pop %v210
    %v212 = vadd.bf16 %v211, 1065369472
    %v213 = vmul.bf16 %v205, %v212
    %v214 = vld [vmem:[#allocation3] sm:$0xff]
    %v215 = vld [vmem:[#allocation3 + $0x8] sm:$0xff]
    %v216 = vld [vmem:[#allocation6] sm:$0xf]
    %v217 = vld [vmem:[#allocation6 + $0x4] sm:$0xf]
    %v218 = vld [vmem:[#allocation6 + $0x8] sm:$0xf]
    %v219 = vld [vmem:[#allocation6 + $0xc] sm:$0xf]
    %v220 = vld [vmem:[#allocation6 + $0x10] sm:$0xf]
    %v221 = vld [vmem:[#allocation6 + $0x14] sm:$0xf]
    %v222 = vld [vmem:[#allocation6 + $0x18] sm:$0xf]
    %v223 = vld [vmem:[#allocation6 + $0x1c] sm:$0xf]
    %v224 = vld [vmem:[#allocation6 + $0x20] sm:$0xf]
    %v225 = vld [vmem:[#allocation6 + $0x24] sm:$0xf]
    %v226 = vld [vmem:[#allocation6 + $0x28] sm:$0xf]
    %v227 = vld [vmem:[#allocation6 + $0x2c] sm:$0xf]
    %v228 = vld [vmem:[#allocation6 + $0x30] sm:$0xf]
    %v229 = vld [vmem:[#allocation6 + $0x34] sm:$0xf]
    %v230 = vld [vmem:[#allocation6 + $0x38] sm:$0xf]
    %v231 = vld [vmem:[#allocation6 + $0x3c] sm:$0xf]
    %v248 = vunpack.c.l.b16 %v216
    %v249 = vunpack.c.l.b16 %v217
    %v250 = vunpack.c.l.b16 %v218
    %v251 = vunpack.c.l.b16 %v219
    %v252 = vunpack.c.l.b16 %v220
    %v253 = vunpack.c.l.b16 %v221
    %v254 = vunpack.c.l.b16 %v222
    %v255 = vunpack.c.l.b16 %v223
    %v256 = vunpack.c.l.b16 %v224
    %v257 = vunpack.c.l.b16 %v225
    %v258 = vunpack.c.l.b16 %v226
    %v259 = vunpack.c.l.b16 %v227
    %v260 = vunpack.c.l.b16 %v228
    %v261 = vunpack.c.l.b16 %v229
    %v262 = vunpack.c.l.b16 %v230
    %v263 = vunpack.c.l.b16 %v231
    %v264 = vpack.c.b16 %v249, %v248
    %v265 = vpack.c.b16 %v251, %v250
    %v266 = vpack.c.b16 %v253, %v252
    %v267 = vpack.c.b16 %v255, %v254
    %v268 = vpack.c.b16 %v257, %v256
    %v269 = vpack.c.b16 %v259, %v258
    %v270 = vpack.c.b16 %v261, %v260
    %v271 = vpack.c.b16 %v263, %v262
    %280 = vmatprep.subr.bf16.mxu0 0
    %281 = vmatpush1.bf16.msra.mxu0 %v264
    %282 = vmatprep.subr.bf16.mxu0 0
    %283 = vmatpush1.bf16.msra.mxu0 %v265
    %284 = vmatprep.subr.bf16.mxu0 0
    %285 = vmatpush1.bf16.msra.mxu0 %v266
    %286 = vmatprep.subr.bf16.mxu0 0
    %287 = vmatpush1.bf16.msra.mxu0 %v267
    %288 = vmatprep.subr.bf16.mxu0 0
    %289 = vmatpush1.bf16.msra.mxu0 %v268
    %290 = vmatprep.subr.bf16.mxu0 0
    %291 = vmatpush1.bf16.msra.mxu0 %v269
    %292 = vmatprep.subr.bf16.mxu0 0
    %293 = vmatpush1.bf16.msra.mxu0 %v270
    %294 = vmatprep.subr.bf16.mxu0 0
    %295 = vmatpush1.bf16.msra.mxu0 %v271
    %296 = vmatprep.subr.bf16.mxu0 0
    %297 = vmatpush1.bf16.msra.mxu0 0
    %298 = vmatprep.subr.bf16.mxu0 0
    %299 = vmatpush1.bf16.msra.mxu0 0
    %300 = vmatprep.subr.bf16.mxu0 0
    %301 = vmatpush1.bf16.msra.mxu0 0
    %302 = vmatprep.subr.bf16.mxu0 0
    %303 = vmatpush1.bf16.msra.mxu0 0
    %304 = vmatprep.subr.bf16.mxu0 0
    %305 = vmatpush1.bf16.msra.mxu0 0
    %306 = vmatprep.subr.bf16.mxu0 0
    %307 = vmatpush1.bf16.msra.mxu0 0
    %308 = vmatprep.subr.bf16.mxu0 0
    %309 = vmatpush1.bf16.msra.mxu0 0
    %310 = vmatprep.subr.bf16.mxu0 0
    %311 = vmatpush1.bf16.msra.mxu0 0
    %312 = vmatprep.mubr.bf16.mxu0 0
    %313 = vmatmul.mubr.bf16.gmra.mrb[0].mxu0 %v213
    %v314 = vpop.f32.mrb[0].mxu0
    %v315 = vadd.f32 0.0, %v314
    %v316 = vpop.f32.mrb[0].mxu0
    %v317 = vpop.f32.mrb[0].mxu0
    %v318 = vadd.f32 0.0, %v317
    %v319 = vpop.f32.mrb[0].mxu0
    %320 = vdwg.mxu0
    %v321 = vadd.f32 %v214, %v315
    %v322 = vadd.f32 %v215, %v318
    %323 = vst [vmem:[#allocation3] sm:$0xff] %v321
    %324 = vst [vmem:[#allocation3 + $0x8] sm:$0xff] %v322
    // Predicated region
    $region34: #{_ff_impl.1} parent=1 // pred_check
      %p325 = pneg %p53
    $region35: #{_ff_impl.1} parent=1 // pred_check_branch
      %327 = sbr.rel (%p325) target = $region37
    $region36: #{_ff_impl.1} parent=1 // pred_region
      %v328 = vld [vmem:[#allocation3] sm:$0xff]
      %v329 = vld [vmem:[#allocation3 + $0x8] sm:$0xff]
      %v330 = vld [vmem:[%s4] sm:$0x1]
      %v332 = vlaneseq
      %v333 = vshrl.u32 %v332, 7
      %v334 = vsub.s32 0, %v333
      %v335 = vrot.slane %v330, %v334
      %v337 = vadd.f32 %v328, %v335
      %v338 = vadd.f32 %v329, %v335
      %339 = vst [vmem:[%s5] sm:$0xff] %v337
      %340 = vst [vmem:[%s5 + $0x8] sm:$0xff] %v338
    $region37: #{_ff_impl.1} parent=1 // pred_fallthru
      _
    // Predicated region
    $region38: #{_ff_impl.1} parent=1 // pred_check
      _
    $region39: #{_ff_impl.1} parent=1 // pred_check_branch
      %342 = sbr.rel (0) target = $region41
    $region40: #{_ff_impl.1} parent=1 // pred_region
      _
    $region41: #{_ff_impl.1} parent=1 // pred_fallthru
      _
    // Predicated region
    $region42: #{_ff_impl.1} parent=1 // pred_check
      _
    $region43: #{_ff_impl.1} parent=1 // pred_check_branch
      %344 = sbr.rel (0) target = $region45
    $region44: #{_ff_impl.1} parent=1 // pred_region
      _
    $region45: #{_ff_impl.1} parent=1 // pred_fallthru
      _
    %345 = vsyncpa [#allocation5], 1
    %346 = vsyncpa [#allocation7], 1

</llo_original>
